<compile_context>
chip_gen: v7x
topology: tpu7x:2x2x1
jax: 0.10.0
libtpu: 0.0.40
codegen_flags: <defaults>
</compile_context>

<pallas_src>
import functools

import jax
import jax.numpy as jnp
from jax.experimental import pallas as pl
from jax.experimental.pallas import tpu as pltpu


def _attention_pooling_kernel(x_ref, w_ref, b_ref, o_ref, *, emb_num, emb_dim, pack):
    # x_ref: (TB, pack*N*D)  w_ref: (pack*N*D, pack*N)  b_ref: (1, pack*N)
    # o_ref: (TB, pack*D)
    x = x_ref[...].astype(jnp.float32)      # load + cast ONCE; reused below
    w = w_ref[...].astype(jnp.float32)
    b = b_ref[...].astype(jnp.float32)

    # One fused MXU dot gives the energies of all `pack` packed batch rows.
    energy = jnp.dot(x, w, preferred_element_type=jnp.float32) + b   # (TB, pack*N)

    nd = emb_num * emb_dim
    chunks = []
    for p in range(pack):                   # pack is a tiny static constant
        eoff = p * emb_num
        if emb_num == 2:
            # Exact 2-way softmax as a logistic: no cross-lane reduce, no recip.
            w0 = 1.0 / (1.0 + jnp.exp(energy[:, eoff + 1:eoff + 2]
                                      - energy[:, eoff:eoff + 1]))
            wts = [w0, 1.0 - w0]
        else:
            # General case: explicit column slices, exact normalization.
            cols = [energy[:, eoff + n:eoff + n + 1] for n in range(emb_num)]
            m = cols[0]
            for c in cols[1:]:
                m = jnp.maximum(m, c)
            es = [jnp.exp(c - m) for c in cols]
            s = es[0]
            for e in es[1:]:
                s = s + e
            wts = [e / s for e in es]

        # outputs = sum_n wts[n] * x[:, base + n*D : base + (n+1)*D]
        base = p * nd
        acc = wts[0] * x[:, base:base + emb_dim]
        for n in range(1, emb_num):
            acc = acc + wts[n] * x[:, base + n * emb_dim:base + (n + 1) * emb_dim]
        chunks.append(acc)

    out = chunks[0] if pack == 1 else jnp.concatenate(chunks, axis=1)  # (TB, pack*D)
    o_ref[...] = out.astype(o_ref.dtype)    # single lane-dense store


def attention_pooling(inputs, weight, bias, *, block_b=4096):
    """inputs: (B, emb_num, emb_dim); weight: (emb_num*emb_dim, emb_num) [transposed
    vs. PyTorch nn.Linear.weight]; bias: (emb_num,)."""
    B, emb_num, emb_dim = inputs.shape
    nd = emb_num * emb_dim

    # --- lane packing factor: `pack` batch rows per 128-lane output row ---
    pack = 1
    if emb_dim < 128 and 128 % emb_dim == 0:
        pack = 128 // emb_dim
        while pack > 1 and B % pack:
            pack //= 2
    bp = B // pack                      # packed row count
    pnd = pack * nd                     # packed input width  (e.g. 256)
    pout = pack * emb_dim               # packed output width (e.g. 128)
    pn = pack * emb_num                 # packed energy width (e.g. 8)

    # Free row-major views (identical memory layout to PyTorch's .view(B, -1)).
    x_packed = inputs.reshape(bp, pnd)
    # Block-diagonal weight (pack copies of W on the diagonal) + tiled bias,
    # built once host/XLA-side.
    w_bd = jnp.kron(jnp.eye(pack, dtype=weight.dtype), weight)       # (pnd, pn)
    b_packed = jnp.tile(bias, pack).reshape(1, pn)

    # --- batch tile (in packed rows): big tiles; >=2 blocks for v7x megacore ---
    if bp <= 8:
        tb = bp
    else:
        cap = max(8, (block_b // pack) // 8 * 8)          # target tile size
        half = ((-(-bp // 2)) + 7) // 8 * 8               # ~half of bp, x8
        tb = max(8, min(cap, half))
    grid = (pl.cdiv(bp, tb),)

    kernel = functools.partial(
        _attention_pooling_kernel, emb_num=emb_num, emb_dim=emb_dim, pack=pack
    )

    itemsize = inputs.dtype.itemsize
    cost = pl.CostEstimate(
        flops=B * (2 * nd * emb_num + 2 * nd),
        transcendentals=B * emb_num,
        bytes_accessed=(B * nd * itemsize + B * emb_dim * itemsize
                        + w_bd.size * w_bd.dtype.itemsize
                        + b_packed.size * b_packed.dtype.itemsize),
    )

    out_packed = pl.pallas_call(
        kernel,
        out_shape=jax.ShapeDtypeStruct((bp, pout), inputs.dtype),
        grid=grid,
        in_specs=[
            pl.BlockSpec((tb, pnd), lambda i: (i, 0)),     # input tile (pipelined)
            pl.BlockSpec((pnd, pn), lambda i: (0, 0)),     # block-diag weight: resident
            pl.BlockSpec((1, pn), lambda i: (0, 0)),       # bias: resident
        ],
        out_specs=pl.BlockSpec((tb, pout), lambda i: (i, 0)),
        compiler_params=pltpu.CompilerParams(
            dimension_semantics=("parallel",),             # shard batch across TCs
        ),
        cost_estimate=cost,
    )(x_packed, w_bd, b_packed)

    # Free row-major view back to (B, emb_dim).
    return out_packed.reshape(B, emb_dim)


def _reference(inputs, weight, bias):
    B = inputs.shape[0]
    energy = inputs.reshape(B, -1) @ weight + bias
    weights = jax.nn.softmax(energy, axis=1)
    return (inputs * weights[:, :, None]).sum(axis=1)


if __name__ == "__main__":
    # Shapes consistent with the module: emb_num=2 (title, image), emb_dim=32.
    # B=64 -> pack=4, 16 packed rows, tile=8 -> grid=(2,) exercises multi-block
    # pipelining and the v7x two-block guarantee.
    B, emb_num, emb_dim = 64, 2, 32

    key = jax.random.PRNGKey(0)
    k_x, k_w, k_b = jax.random.split(key, 3)

    inputs = jax.random.normal(k_x, (B, emb_num, emb_dim), dtype=jnp.float32)
    # Deterministic init of nn.Linear(emb_dim*emb_num, emb_num) params
    # (weight stored transposed as (in_features, out_features)).
    fan_in = emb_dim * emb_num
    bound = 1.0 / (fan_in ** 0.5)
    weight = jax.random.uniform(k_w, (fan_in, emb_num), jnp.float32, -bound, bound)
    bias = jax.random.uniform(k_b, (emb_num,), jnp.float32, -bound, bound)

    # TODO(synk): tensorboard logging branch (tb_tools) is host-side I/O, not a kernel op.
    out = attention_pooling(inputs, weight, bias)
    out = jax.block_until_ready(out)

    ref = _reference(inputs, weight, bias)
    assert out.shape == (B, emb_dim)
    # Exact softmax normalization in-kernel -> tight tolerance.
    assert jnp.allclose(out, ref, atol=1e-4, rtol=1e-4)

    print("KERNEL_OK")
</pallas_src>

<mosaic_0001>
module attributes {stable_mosaic.version = 11 : i64} {
  func.func @_attention_pooling_kernel(%arg0: i32, %arg1: memref<8x256xf32, #tpu.memory_space<vmem>>, %arg2: memref<256x8xf32, #tpu.memory_space<vmem>>, %arg3: memref<1x8xf32, #tpu.memory_space<vmem>>, %arg4: memref<8x128xf32, #tpu.memory_space<vmem>>) attributes {dimension_semantics = [#tpu.dimension_semantics<parallel>], iteration_bounds = array<i64: 2>, scalar_prefetch = 0 : i64, scratch_operands = 0 : i64, tpu.core_type = #tpu.core_type<tc>, window_params = [{transform_indices = @transform_0, window_bounds = array<i64: 8, 256>}, {pipeline_mode = #tpu.pipeline_mode<synchronous>, transform_indices = @transform_1, window_bounds = array<i64: 256, 8>}, {pipeline_mode = #tpu.pipeline_mode<synchronous>, transform_indices = @transform_2, window_bounds = array<i64: 1, 8>}, {transform_indices = @transform_3, window_bounds = array<i64: 8, 128>}]} {
    %c0 = arith.constant 0 : index
    %c0_0 = arith.constant 0 : index
    %0 = vector.load %arg1[%c0, %c0_0] : memref<8x256xf32, #tpu.memory_space<vmem>>, vector<8x256xf32>
    %c0_1 = arith.constant 0 : index
    %c0_2 = arith.constant 0 : index
    %1 = vector.load %arg2[%c0_1, %c0_2] : memref<256x8xf32, #tpu.memory_space<vmem>>, vector<256x8xf32>
    %c0_3 = arith.constant 0 : index
    %c0_4 = arith.constant 0 : index
    %2 = vector.load %arg3[%c0_3, %c0_4] : memref<1x8xf32, #tpu.memory_space<vmem>>, vector<1x8xf32>
    %cst = arith.constant dense<0.000000e+00> : vector<8x8xf32>
    %3 = tpu.matmul %0, %1, %cst {dimension_numbers = #tpu.dot_dimension_numbers<[1], [0], [0], [1], [0, 0, 1, 1], [], []>} : vector<8x256xf32>, vector<256x8xf32>, vector<8x8xf32> -> vector<8x8xf32>
    %4 = vector.broadcast %2 : vector<1x8xf32> to vector<8x8xf32>
    %5 = arith.addf %3, %4 : vector<8x8xf32>
    %6 = vector.extract_strided_slice %5 {offsets = [0, 1], sizes = [8, 1], strides = [1, 1]} : vector<8x8xf32> to vector<8x1xf32>
    %7 = vector.extract_strided_slice %5 {offsets = [0, 0], sizes = [8, 1], strides = [1, 1]} : vector<8x8xf32> to vector<8x1xf32>
    %8 = arith.subf %6, %7 : vector<8x1xf32>
    %9 = math.exp %8 : vector<8x1xf32>
    %cst_5 = arith.constant 1.000000e+00 : f32
    %10 = vector.broadcast %cst_5 : f32 to vector<8x1xf32>
    %11 = arith.addf %10, %9 : vector<8x1xf32>
    %cst_6 = arith.constant 1.000000e+00 : f32
    %12 = vector.broadcast %cst_6 : f32 to vector<8x1xf32>
    %13 = arith.divf %12, %11 : vector<8x1xf32>
    %cst_7 = arith.constant 1.000000e+00 : f32
    %14 = vector.broadcast %cst_7 : f32 to vector<8x1xf32>
    %15 = arith.subf %14, %13 : vector<8x1xf32>
    %16 = vector.extract_strided_slice %0 {offsets = [0, 0], sizes = [8, 32], strides = [1, 1]} : vector<8x256xf32> to vector<8x32xf32>
    %17 = vector.broadcast %13 : vector<8x1xf32> to vector<8x32xf32>
    %18 = arith.mulf %17, %16 : vector<8x32xf32>
    %19 = vector.extract_strided_slice %0 {offsets = [0, 32], sizes = [8, 32], strides = [1, 1]} : vector<8x256xf32> to vector<8x32xf32>
    %20 = vector.broadcast %15 : vector<8x1xf32> to vector<8x32xf32>
    %21 = arith.mulf %20, %19 : vector<8x32xf32>
    %22 = arith.addf %18, %21 : vector<8x32xf32>
    %23 = vector.extract_strided_slice %5 {offsets = [0, 3], sizes = [8, 1], strides = [1, 1]} : vector<8x8xf32> to vector<8x1xf32>
    %24 = vector.extract_strided_slice %5 {offsets = [0, 2], sizes = [8, 1], strides = [1, 1]} : vector<8x8xf32> to vector<8x1xf32>
    %25 = arith.subf %23, %24 : vector<8x1xf32>
    %26 = math.exp %25 : vector<8x1xf32>
    %cst_8 = arith.constant 1.000000e+00 : f32
    %27 = vector.broadcast %cst_8 : f32 to vector<8x1xf32>
    %28 = arith.addf %27, %26 : vector<8x1xf32>
    %cst_9 = arith.constant 1.000000e+00 : f32
    %29 = vector.broadcast %cst_9 : f32 to vector<8x1xf32>
    %30 = arith.divf %29, %28 : vector<8x1xf32>
    %cst_10 = arith.constant 1.000000e+00 : f32
    %31 = vector.broadcast %cst_10 : f32 to vector<8x1xf32>
    %32 = arith.subf %31, %30 : vector<8x1xf32>
    %33 = vector.extract_strided_slice %0 {offsets = [0, 64], sizes = [8, 32], strides = [1, 1]} : vector<8x256xf32> to vector<8x32xf32>
    %34 = vector.broadcast %30 : vector<8x1xf32> to vector<8x32xf32>
    %35 = arith.mulf %34, %33 : vector<8x32xf32>
    %36 = vector.extract_strided_slice %0 {offsets = [0, 96], sizes = [8, 32], strides = [1, 1]} : vector<8x256xf32> to vector<8x32xf32>
    %37 = vector.broadcast %32 : vector<8x1xf32> to vector<8x32xf32>
    %38 = arith.mulf %37, %36 : vector<8x32xf32>
    %39 = arith.addf %35, %38 : vector<8x32xf32>
    %40 = vector.extract_strided_slice %5 {offsets = [0, 5], sizes = [8, 1], strides = [1, 1]} : vector<8x8xf32> to vector<8x1xf32>
    %41 = vector.extract_strided_slice %5 {offsets = [0, 4], sizes = [8, 1], strides = [1, 1]} : vector<8x8xf32> to vector<8x1xf32>
    %42 = arith.subf %40, %41 : vector<8x1xf32>
    %43 = math.exp %42 : vector<8x1xf32>
    %cst_11 = arith.constant 1.000000e+00 : f32
    %44 = vector.broadcast %cst_11 : f32 to vector<8x1xf32>
    %45 = arith.addf %44, %43 : vector<8x1xf32>
    %cst_12 = arith.constant 1.000000e+00 : f32
    %46 = vector.broadcast %cst_12 : f32 to vector<8x1xf32>
    %47 = arith.divf %46, %45 : vector<8x1xf32>
    %cst_13 = arith.constant 1.000000e+00 : f32
    %48 = vector.broadcast %cst_13 : f32 to vector<8x1xf32>
    %49 = arith.subf %48, %47 : vector<8x1xf32>
    %50 = vector.extract_strided_slice %0 {offsets = [0, 128], sizes = [8, 32], strides = [1, 1]} : vector<8x256xf32> to vector<8x32xf32>
    %51 = vector.broadcast %47 : vector<8x1xf32> to vector<8x32xf32>
    %52 = arith.mulf %51, %50 : vector<8x32xf32>
    %53 = vector.extract_strided_slice %0 {offsets = [0, 160], sizes = [8, 32], strides = [1, 1]} : vector<8x256xf32> to vector<8x32xf32>
    %54 = vector.broadcast %49 : vector<8x1xf32> to vector<8x32xf32>
    %55 = arith.mulf %54, %53 : vector<8x32xf32>
    %56 = arith.addf %52, %55 : vector<8x32xf32>
    %57 = vector.extract_strided_slice %5 {offsets = [0, 7], sizes = [8, 1], strides = [1, 1]} : vector<8x8xf32> to vector<8x1xf32>
    %58 = vector.extract_strided_slice %5 {offsets = [0, 6], sizes = [8, 1], strides = [1, 1]} : vector<8x8xf32> to vector<8x1xf32>
    %59 = arith.subf %57, %58 : vector<8x1xf32>
    %60 = math.exp %59 : vector<8x1xf32>
    %cst_14 = arith.constant 1.000000e+00 : f32
    %61 = vector.broadcast %cst_14 : f32 to vector<8x1xf32>
    %62 = arith.addf %61, %60 : vector<8x1xf32>
    %cst_15 = arith.constant 1.000000e+00 : f32
    %63 = vector.broadcast %cst_15 : f32 to vector<8x1xf32>
    %64 = arith.divf %63, %62 : vector<8x1xf32>
    %cst_16 = arith.constant 1.000000e+00 : f32
    %65 = vector.broadcast %cst_16 : f32 to vector<8x1xf32>
    %66 = arith.subf %65, %64 : vector<8x1xf32>
    %67 = vector.extract_strided_slice %0 {offsets = [0, 192], sizes = [8, 32], strides = [1, 1]} : vector<8x256xf32> to vector<8x32xf32>
    %68 = vector.broadcast %64 : vector<8x1xf32> to vector<8x32xf32>
    %69 = arith.mulf %68, %67 : vector<8x32xf32>
    %70 = vector.extract_strided_slice %0 {offsets = [0, 224], sizes = [8, 32], strides = [1, 1]} : vector<8x256xf32> to vector<8x32xf32>
    %71 = vector.broadcast %66 : vector<8x1xf32> to vector<8x32xf32>
    %72 = arith.mulf %71, %70 : vector<8x32xf32>
    %73 = arith.addf %69, %72 : vector<8x32xf32>
    %74 = tpu.concatenate %22, %39, %56, %73 in 1 : vector<8x32xf32>, vector<8x32xf32>, vector<8x32xf32>, vector<8x32xf32> -> vector<8x128xf32>
    %c0_17 = arith.constant 0 : index
    %c0_18 = arith.constant 0 : index
    %75 = vector.load %arg4[%c0_17, %c0_18] : memref<8x128xf32, #tpu.memory_space<vmem>>, vector<8x128xf32>
    tpu.vector_store %arg4[%c0_17, %c0_18], %74 {strides = array<i32>} : memref<8x128xf32, #tpu.memory_space<vmem>>, vector<8x128xf32>,
    return
  }
  func.func @transform_0(%arg0: i32) -> (i32, i32) {
    %c0_i32 = arith.constant 0 : i32
    %c0_i32_0 = arith.constant 0 : i32
    return %arg0, %c0_i32 : i32, i32
  }
  func.func @transform_1(%arg0: i32) -> (i32, i32) {
    %c0_i32 = arith.constant 0 : i32
    %c0_i32_0 = arith.constant 0 : i32
    %c0_i32_1 = arith.constant 0 : i32
    return %c0_i32, %c0_i32_0 : i32, i32
  }
  func.func @transform_2(%arg0: i32) -> (i32, i32) {
    %c0_i32 = arith.constant 0 : i32
    %c0_i32_0 = arith.constant 0 : i32
    %c0_i32_1 = arith.constant 0 : i32
    return %c0_i32, %c0_i32_0 : i32, i32
  }
  func.func @transform_3(%arg0: i32) -> (i32, i32) {
    %c0_i32 = arith.constant 0 : i32
    %c0_i32_0 = arith.constant 0 : i32
    return %arg0, %c0_i32 : i32, i32
  }
}

</mosaic_0001>

<llo_original>
// kernel: tpu_custom_call.1
$region0: #{tpu_custom_call.1}
  #allocation0 [shape = 'u32[]', space=smem, size = 0x4, offset = 0x4, fixed_abs, tag = 'smem constant byte address 0x4 - core index']
  #allocation1 [shape = 'u32[144,128]{1,0:T(1,128)}', space=vmem, size = 0x12000, scoped, tag = 'internal scratch']
  %s0 = inlined_call_operand.vmem [shape: f32[16,256], index: 0, kind: input, shape index: {}]
  %s1 = inlined_call_operand.vmem [shape: f32[256,8], index: 1, kind: input, shape index: {}]
  %s2 = inlined_call_operand.vmem [shape: f32[1,8], index: 2, kind: input, shape index: {}]
  %s3 = inlined_call_operand.hbm [shape: f32[16,128], index: 3, kind: output, shape index: {}]
  %s4 = sld [smem:[#allocation0]]
  $region45: #{tpu_custom_call.1} parent=0
    _
  %s6 = ssub.s32 1, %s4
  %s7 = scalar_select 0, %s6, %s4
  $region1: #{tpu_custom_call.1} parent=0
    #allocation2 [shape = 'u8[8192]{0}', space=vmem, size = 0x2000, scoped, tag = 'output window, operand 0']
    #allocation3 [shape = 's32[2]{0}', space=sflag, size = 0x8, scoped, tag = 'scoped memory for tpu_custom_call.1']
    %8 = vsyncpa [#allocation3], 0
    %s9 = scalar_lea.sflag [#allocation3], 1
    %10 = vsyncpa %s9, 0
    loop: start=0, step=1, limit=4
    $region2: #{tpu_custom_call.1} parent=1 // loop_pre_header
      _
    $region3: #{tpu_custom_call.1} parent=1 // loop_header
      %s12 = sphi 0, %s16
      %p13 = scmp.ge.s32.totalorder %s12, 4
      %s22 = sphi 0, %s24
      %s25 = sphi 0, %s22
      %s26 = sphi 0, %s25
      %s42 = sphi 0, %s26
      %s46 = sphi 0, %s46
      %s48 = sphi 0, %s46
      %s49 = sphi 0, %s48
      %s63 = sphi 0, %s49
      %s67 = sphi 0, %s67
      %s69 = sphi 0, %s67
      %s70 = sphi 0, %s69
      %s84 = sphi 0, %s70
      %s90 = sphi 0, %s92
      %s93 = sphi 0, %s90
      %s94 = sphi 0, %s93
      %s110 = sphi 0, %s94
    $region4: #{tpu_custom_call.1} parent=1 // loop_header_branch
      %15 = sbr.rel (%p13) target = $region8
    $region5: #{tpu_custom_call.1} parent=1 // loop_body
      %s17 = ssub.s32 %s12, 1
      %s18 = ssub.s32 %s12, 2
      %s19 = sadd.s32 %s12, 1
      %s20 = ssub.s32 %s12, %s19
      %p21 = scmp.eq.s32.totalorder %s20, 0
      %s23 = sadd.s32 %s22, 1
      %s24 = scalar_select %p21, %s22, %s23
      %p27 = pneg %p21
      %p28 = scmp.eq.s32.totalorder %s12, 1
      %p29 = por %p27, %p28
      %p30 = scmp.ne.s32.totalorder %s22, %s25
      %p31 = scmp.eq.s32.totalorder %s12, 0
      %p32 = por %p30, %p31
      %p33 = scmp.ne.s32.totalorder %s22, %s25
      %p34 = scmp.eq.s32.totalorder %s17, 1
      %p35 = por %p33, %p34
      %p36 = scmp.ne.s32.totalorder %s25, %s26
      %p37 = scmp.eq.s32.totalorder %s17, 0
      %p38 = por %p36, %p37
      %p39 = scmp.ne.s32.totalorder %s25, %s26
      %p40 = scmp.eq.s32.totalorder %s18, 1
      %p41 = por %p39, %p40
      %p43 = scmp.ne.s32.totalorder %s26, %s42
      %p44 = scmp.eq.s32.totalorder %s18, 0
      %p45 = por %p43, %p44
      %s47 = sadd.s32 %s46, 1
      %p50 = scmp.eq.s32.totalorder %s12, 1
      %p51 = scmp.ne.s32.totalorder %s46, %s48
      %p52 = scmp.eq.s32.totalorder %s12, 0
      %p53 = por %p51, %p52
      %p54 = scmp.ne.s32.totalorder %s46, %s48
      %p55 = scmp.eq.s32.totalorder %s17, 1
      %p56 = por %p54, %p55
      %p57 = scmp.ne.s32.totalorder %s48, %s49
      %p58 = scmp.eq.s32.totalorder %s17, 0
      %p59 = por %p57, %p58
      %p60 = scmp.ne.s32.totalorder %s48, %s49
      %p61 = scmp.eq.s32.totalorder %s18, 1
      %p62 = por %p60, %p61
      %p64 = scmp.ne.s32.totalorder %s49, %s63
      %p65 = scmp.eq.s32.totalorder %s18, 0
      %p66 = por %p64, %p65
      %s68 = sadd.s32 %s67, 1
      %p71 = scmp.eq.s32.totalorder %s12, 1
      %p72 = scmp.ne.s32.totalorder %s67, %s69
      %p73 = scmp.eq.s32.totalorder %s12, 0
      %p74 = por %p72, %p73
      %p75 = scmp.ne.s32.totalorder %s67, %s69
      %p76 = scmp.eq.s32.totalorder %s17, 1
      %p77 = por %p75, %p76
      %p78 = scmp.ne.s32.totalorder %s69, %s70
      %p79 = scmp.eq.s32.totalorder %s17, 0
      %p80 = por %p78, %p79
      %p81 = scmp.ne.s32.totalorder %s69, %s70
      %p82 = scmp.eq.s32.totalorder %s18, 1
      %p83 = por %p81, %p82
      %p85 = scmp.ne.s32.totalorder %s70, %s84
      %p86 = scmp.eq.s32.totalorder %s18, 0
      %p87 = por %p85, %p86
      %s88 = ssub.s32 %s12, %s19
      %p89 = scmp.eq.s32.totalorder %s88, 0
      %s91 = sadd.s32 %s90, 1
      %s92 = scalar_select %p89, %s90, %s91
      %p95 = pneg %p89
      %p96 = scmp.eq.s32.totalorder %s12, 1
      %p97 = por %p95, %p96
      %p98 = scmp.ne.s32.totalorder %s90, %s93
      %p99 = scmp.eq.s32.totalorder %s12, 0
      %p100 = por %p98, %p99
      %p101 = scmp.ne.s32.totalorder %s90, %s93
      %p102 = scmp.eq.s32.totalorder %s17, 1
      %p103 = por %p101, %p102
      %p104 = scmp.ne.s32.totalorder %s93, %s94
      %p105 = scmp.eq.s32.totalorder %s17, 0
      %p106 = por %p104, %p105
      %p107 = scmp.ne.s32.totalorder %s93, %s94
      %p108 = scmp.eq.s32.totalorder %s18, 1
      %p109 = por %p107, %p108
      %p111 = scmp.ne.s32.totalorder %s94, %s110
      %p112 = scmp.eq.s32.totalorder %s18, 0
      %p113 = por %p111, %p112
      %p114 = scmp.le.s32.totalorder 1, %s12
      %p115 = scmp.lt.s32.totalorder %s12, 3
      %p116 = pnand %p114, %p115
      %p117 = pneg %p116
      // Predicated region
      $region9: #{tpu_custom_call.1} parent=5 // pred_check
        _
      $region10: #{tpu_custom_call.1} parent=5 // pred_check_branch
        %119 = sbr.rel (%p116) target = $region12
      $region11: #{tpu_custom_call.1} parent=5 // pred_region
        %s120 = ssub.s32 %s12, 1
        // Predicated region
        $region13: #{tpu_custom_call.1} parent=11 // pred_check
          %p121 = pneg %p59
        $region14: #{tpu_custom_call.1} parent=11 // pred_check_branch
          %123 = sbr.rel (%p121) target = $region16
        $region15: #{tpu_custom_call.1} parent=11 // pred_region
          _
        $region16: #{tpu_custom_call.1} parent=11 // pred_fallthru
          _
        // Predicated region
        $region17: #{tpu_custom_call.1} parent=11 // pred_check
          %p124 = pneg %p80
        $region18: #{tpu_custom_call.1} parent=11 // pred_check_branch
          %126 = sbr.rel (%p124) target = $region20
        $region19: #{tpu_custom_call.1} parent=11 // pred_region
          _
        $region20: #{tpu_custom_call.1} parent=11 // pred_fallthru
          _
      $region12: #{tpu_custom_call.1} parent=5 // pred_fallthru
        _
      %p127 = scmp.lt.s32.totalorder %s12, 2
      // Predicated region
      $region21: #{tpu_custom_call.1} parent=5 // pred_check
        %p128 = pneg %p127
      $region22: #{tpu_custom_call.1} parent=5 // pred_check_branch
        %130 = sbr.rel (%p128) target = $region24
      $region23: #{tpu_custom_call.1} parent=5 // pred_region
        // Predicated region
        $region25: #{tpu_custom_call.1} parent=23 // pred_check
          %p131 = pneg %p32
        $region26: #{tpu_custom_call.1} parent=23 // pred_check_branch
          %133 = sbr.rel (%p131) target = $region28
        $region27: #{tpu_custom_call.1} parent=23 // pred_region
          %p134 = scmp.lt.s32.totalorder %s12, 1
          %s135 = scalar_select %p134, %s12, 1
          %s136 = smul.addr %s135, 2
          %s137 = smul.addr %s136, 8
          %s138 = scalar_lea.vmem %s0, %s137
        $region28: #{tpu_custom_call.1} parent=23 // pred_fallthru
          _
      $region24: #{tpu_custom_call.1} parent=5 // pred_fallthru
        _
      %p139 = scmp.le.s32.totalorder 1, %s12
      %p140 = scmp.lt.s32.totalorder %s12, 3
      %p141 = pnand %p139, %p140
      %p142 = pneg %p141
      // Predicated region
      $region29: #{tpu_custom_call.1} parent=5 // pred_check
        _
      $region30: #{tpu_custom_call.1} parent=5 // pred_check_branch
        %144 = sbr.rel (%p141) target = $region32
      $region31: #{tpu_custom_call.1} parent=5 // pred_region
        %s145 = ssub.s32 %s12, 1
        %p146 = scmp.lt.s32.totalorder %s17, 1
        %s147 = scalar_select %p146, %s17, 1
        %s148 = smul.addr %s147, 2
        %s149 = smul.addr %s148, 8
        %s150 = scalar_lea.vmem %s0, %s149
        %p151 = pneg %p38
        %p152 = pneg %p35
        %p153 = pneg %p59
        %p154 = pneg %p56
        %p155 = pneg %p80
        %p156 = pneg %p77
        %p157 = pneg %p106
        %p158 = pneg %p103
        %s159 = sand.u32 %s93, 1
        %s160 = scalar_lea.sflag [#allocation3], %s159
        %s161 = sand.u32 %s93, 1
        %s162 = smul.addr %s161, 8
        %s163 = scalar_lea.vmem [#allocation2], %s162
        %p164 = scmp.lt.s32.totalorder %s17, 1
        %s165 = scalar_select %p164, %s17, 1
        %s166 = smul.addr %s165, 2
        %s167 = smul.addr %s166, 8
        %s168 = scalar_lea.vmem %s0, %s167
        %v169 = vld [vmem:[%s168] sm:$0xff]
        %v170 = vld [vmem:[%s168 + $0x8] sm:$0xff]
        %v171 = vld [vmem:[%s1] sm:$0xff]
        %v172 = vld [vmem:[%s1 + $0x8] sm:$0xff]
        %v173 = vld [vmem:[%s1 + $0x10] sm:$0xff]
        %v174 = vld [vmem:[%s1 + $0x18] sm:$0xff]
        %v175 = vld [vmem:[%s1 + $0x20] sm:$0xff]
        %v176 = vld [vmem:[%s1 + $0x28] sm:$0xff]
        %v177 = vld [vmem:[%s1 + $0x30] sm:$0xff]
        %v178 = vld [vmem:[%s1 + $0x38] sm:$0xff]
        %v179 = vld [vmem:[%s1 + $0x40] sm:$0xff]
        %v180 = vld [vmem:[%s1 + $0x48] sm:$0xff]
        %v181 = vld [vmem:[%s1 + $0x50] sm:$0xff]
        %v182 = vld [vmem:[%s1 + $0x58] sm:$0xff]
        %v183 = vld [vmem:[%s1 + $0x60] sm:$0xff]
        %v184 = vld [vmem:[%s1 + $0x68] sm:$0xff]
        %v185 = vld [vmem:[%s1 + $0x70] sm:$0xff]
        %v186 = vld [vmem:[%s1 + $0x78] sm:$0xff]
        %v187 = vld [vmem:[%s1 + $0x80] sm:$0xff]
        %v188 = vld [vmem:[%s1 + $0x88] sm:$0xff]
        %v189 = vld [vmem:[%s1 + $0x90] sm:$0xff]
        %v190 = vld [vmem:[%s1 + $0x98] sm:$0xff]
        %v191 = vld [vmem:[%s1 + $0xa0] sm:$0xff]
        %v192 = vld [vmem:[%s1 + $0xa8] sm:$0xff]
        %v193 = vld [vmem:[%s1 + $0xb0] sm:$0xff]
        %v194 = vld [vmem:[%s1 + $0xb8] sm:$0xff]
        %v195 = vld [vmem:[%s1 + $0xc0] sm:$0xff]
        %v196 = vld [vmem:[%s1 + $0xc8] sm:$0xff]
        %v197 = vld [vmem:[%s1 + $0xd0] sm:$0xff]
        %v198 = vld [vmem:[%s1 + $0xd8] sm:$0xff]
        %v199 = vld [vmem:[%s1 + $0xe0] sm:$0xff]
        %v200 = vld [vmem:[%s1 + $0xe8] sm:$0xff]
        %v201 = vld [vmem:[%s1 + $0xf0] sm:$0xff]
        %v202 = vld [vmem:[%s1 + $0xf8] sm:$0xff]
        %v203 = vld [vmem:[%s2] sm:$0x1]
        %v205 = vlaneseq
        %v206 = vshrl.u32 %v205, 7
        %v207 = vsub.s32 0, %v206
        %v208 = vrot.slane %v203, %v207
        %210 = vmatprep.subr.mxu0 0.0
        %211 = vmatpush1.msra.mxu0 %v171
        %212 = vmatprep.subr.mxu0 0.0
        %213 = vmatpush1.msra.mxu0 %v172
        %214 = vmatprep.subr.mxu0 0.0
        %215 = vmatpush1.msra.mxu0 %v173
        %216 = vmatprep.subr.mxu0 0.0
        %217 = vmatpush1.msra.mxu0 %v174
        %218 = vmatprep.subr.mxu0 0.0
        %219 = vmatpush1.msra.mxu0 %v175
        %220 = vmatprep.subr.mxu0 0.0
        %221 = vmatpush1.msra.mxu0 %v176
        %222 = vmatprep.subr.mxu0 0.0
        %223 = vmatpush1.msra.mxu0 %v177
        %224 = vmatprep.subr.mxu0 0.0
        %225 = vmatpush1.msra.mxu0 %v178
        %226 = vmatprep.subr.mxu0 0.0
        %227 = vmatpush1.msra.mxu0 %v179
        %228 = vmatprep.subr.mxu0 0.0
        %229 = vmatpush1.msra.mxu0 %v180
        %230 = vmatprep.subr.mxu0 0.0
        %231 = vmatpush1.msra.mxu0 %v181
        %232 = vmatprep.subr.mxu0 0.0
        %233 = vmatpush1.msra.mxu0 %v182
        %234 = vmatprep.subr.mxu0 0.0
        %235 = vmatpush1.msra.mxu0 %v183
        %236 = vmatprep.subr.mxu0 0.0
        %237 = vmatpush1.msra.mxu0 %v184
        %238 = vmatprep.subr.mxu0 0.0
        %239 = vmatpush1.msra.mxu0 %v185
        %240 = vmatprep.subr.mxu0 0.0
        %241 = vmatpush1.msra.mxu0 %v186
        %242 = vmatprep.subr.mxu0 0.0
        %243 = vmatpush1.msra.mxu0 %v187
        %244 = vmatprep.subr.mxu0 0.0
        %245 = vmatpush1.msra.mxu0 %v188
        %246 = vmatprep.subr.mxu0 0.0
        %247 = vmatpush1.msra.mxu0 %v189
        %248 = vmatprep.subr.mxu0 0.0
        %249 = vmatpush1.msra.mxu0 %v190
        %250 = vmatprep.subr.mxu0 0.0
        %251 = vmatpush1.msra.mxu0 %v191
        %252 = vmatprep.subr.mxu0 0.0
        %253 = vmatpush1.msra.mxu0 %v192
        %254 = vmatprep.subr.mxu0 0.0
        %255 = vmatpush1.msra.mxu0 %v193
        %256 = vmatprep.subr.mxu0 0.0
        %257 = vmatpush1.msra.mxu0 %v194
        %258 = vmatprep.subr.mxu0 0.0
        %259 = vmatpush1.msra.mxu0 %v195
        %260 = vmatprep.subr.mxu0 0.0
        %261 = vmatpush1.msra.mxu0 %v196
        %262 = vmatprep.subr.mxu0 0.0
        %263 = vmatpush1.msra.mxu0 %v197
        %264 = vmatprep.subr.mxu0 0.0
        %265 = vmatpush1.msra.mxu0 %v198
        %266 = vmatprep.subr.mxu0 0.0
        %267 = vmatpush1.msra.mxu0 %v199
        %268 = vmatprep.subr.mxu0 0.0
        %269 = vmatpush1.msra.mxu0 %v200
        %270 = vmatprep.subr.mxu0 0.0
        %271 = vmatpush1.msra.mxu0 %v201
        %272 = vmatprep.subr.mxu0 0.0
        %273 = vmatpush1.msra.mxu0 %v202
        %274 = vmatprep.mubr.f32.mxu0 %v170
        %275 = vmatmul.mubr.f32.gmra.mrb[0].mxu0 %v169
        %v276 = vpop.f32.mrb[0].mxu0
        %v277 = vadd.f32 %v208, %v276
        %v278 = vpop.f32.mrb[0].mxu0
        %279 = vdwg.mxu0
        %281 = vrot.lane.b32.xlu0 %v277, 1
        %v282 = vpop.permute.xlu0 %281
        %v284 = vsub.f32 %v277, %v282
        %v285 = vmul.f32 %v284, 1.442695
        %v286 = vpow.pop %v285
        %v287 = vadd.f32 %v286, 1.0
        %v288 = vrcp.pop %v287
        %v289 = vmul.f32 1.0, %v288
        %v290 = vsub.f32 1.0, %v289
        %292 = vset.pattern.permute.xlu0 1
        %293 = vperm.xlu0 %292, %v289
        %v294 = vpop.permute.xlu0 %293
        %v296 = vmul.f32 %v294, %v169
        %298 = vset.pattern.permute.xlu0 1
        %299 = vperm.xlu0 %298, %v290
        %v300 = vpop.permute.xlu0 %299
        %v302 = vmul.f32 %v300, %v169
        %304 = vrot.lane.b32.xlu0 %v302, 96
        %v305 = vpop.permute.xlu0 %304
        %v307 = vadd.f32 %v296, %v305
        %308 = vset.pattern.permute.xlu0 3
        %309 = vperm.xlu0 %308, %v289
        %v310 = vpop.permute.xlu0 %309
        %v312 = vmul.f32 %v310, %v169
        %313 = vset.pattern.permute.xlu0 3
        %314 = vperm.xlu0 %313, %v290
        %v315 = vpop.permute.xlu0 %314
        %v317 = vmul.f32 %v315, %v169
        %319 = vrot.lane.b32.xlu0 %v317, 96
        %v320 = vpop.permute.xlu0 %319
        %v322 = vadd.f32 %v312, %v320
        %323 = vset.pattern.permute.xlu0 5
        %324 = vperm.xlu0 %323, %v289
        %v325 = vpop.permute.xlu0 %324
        %v327 = vmul.f32 %v325, %v170
        %328 = vset.pattern.permute.xlu0 5
        %329 = vperm.xlu0 %328, %v290
        %v330 = vpop.permute.xlu0 %329
        %v332 = vmul.f32 %v330, %v170
        %334 = vrot.lane.b32.xlu0 %v332, 96
        %v335 = vpop.permute.xlu0 %334
        %v337 = vadd.f32 %v327, %v335
        %338 = vset.pattern.permute.xlu0 7
        %339 = vperm.xlu0 %338, %v289
        %v340 = vpop.permute.xlu0 %339
        %v342 = vmul.f32 %v340, %v170
        %343 = vset.pattern.permute.xlu0 7
        %344 = vperm.xlu0 %343, %v290
        %v345 = vpop.permute.xlu0 %344
        %v347 = vmul.f32 %v345, %v170
        %349 = vrot.lane.b32.xlu0 %v347, 96
        %v350 = vpop.permute.xlu0 %349
        %v352 = vadd.f32 %v342, %v350
        %354 = vrot.lane.b32.xlu0 %v322, 96
        %v355 = vpop.permute.xlu0 %354
        %358 = vrot.lane.b32.xlu0 %v337, 64
        %v359 = vpop.permute.xlu0 %358
        %362 = vrot.lane.b32.xlu0 %v352, 32
        %v363 = vpop.permute.xlu0 %362
        %vm365 = vcmask 261120
        %v366 = vsel %vm365, %v307, %v355
        %vm367 = vcmask 523264
        %v368 = vsel %vm367, %v366, %v359
        %vm369 = vcmask 785408
        %v370 = vsel %vm369, %v368, %v363
        %371 = vst [vmem:[%s163] sm:$0xff] %v370
        %s372 = sand.u32 %s93, 1
        %s373 = scalar_lea.sflag [#allocation3], %s372
        %s374 = sand.u32 %s93, 1
        %s375 = smul.addr %s374, 8
        %s376 = scalar_lea.vmem [#allocation2], %s375
        // Predicated region
        $region33: #{tpu_custom_call.1} parent=31 // pred_check
          %p377 = pneg %p103
        $region34: #{tpu_custom_call.1} parent=31 // pred_check_branch
          %379 = sbr.rel (%p377) target = $region36
        $region35: #{tpu_custom_call.1} parent=31 // pred_region
          %s381 = ssub.s32 128, 128
          %382 = vsyncadd %s373, %s381
          %s383 = smul.addr %s17, 128
          %s384 = scalar_lea.hbm %s3, %s383
          %s386 = sshll.u32 %s376, 4
          %s387 = int_to_ptr.vmem [resolvable:$true] %s386
          %389 = dma.vmem_to_hbm [thread:$0]  %s387, 128, %s384, %s373
        $region36: #{tpu_custom_call.1} parent=31 // pred_fallthru
          _
      $region32: #{tpu_custom_call.1} parent=5 // pred_fallthru
        _
      %p390 = scmp.le.s32.totalorder 2, %s12
      // Predicated region
      $region37: #{tpu_custom_call.1} parent=5 // pred_check
        %p391 = pneg %p390
      $region38: #{tpu_custom_call.1} parent=5 // pred_check_branch
        %393 = sbr.rel (%p391) target = $region40
      $region39: #{tpu_custom_call.1} parent=5 // pred_region
        %s394 = ssub.s32 %s12, 2
        // Predicated region
        $region41: #{tpu_custom_call.1} parent=39 // pred_check
          %p395 = pneg %p109
        $region42: #{tpu_custom_call.1} parent=39 // pred_check_branch
          %397 = sbr.rel (%p395) target = $region44
        $region43: #{tpu_custom_call.1} parent=39 // pred_region
          %s398 = sand.u32 %s94, 1
          %s399 = scalar_lea.sflag [#allocation3], %s398
          %s400 = sand.u32 %s94, 1
          %s401 = smul.addr %s400, 8
          %s402 = scalar_lea.vmem [#allocation2], %s401
          %403 = dma.done %s399, 128
        $region44: #{tpu_custom_call.1} parent=39 // pred_fallthru
          _
      $region40: #{tpu_custom_call.1} parent=5 // pred_fallthru
        _
    $region6: #{tpu_custom_call.1} parent=1 // loop_footer
      %s16 = sadd.s32 1, %s12
    $region7: #{tpu_custom_call.1} parent=1 // loop_footer_branch
      %11 = sbr.rel target = $region3
    $region8: #{tpu_custom_call.1} parent=1 // loop_exit
      _
    %404 = vsyncpa [#allocation3], 1
    %s405 = scalar_lea.sflag [#allocation3], 1
    %406 = vsyncpa %s405, 1

</llo_original>
